<compile_context>
chip_gen: v6e
topology: v6e:2x2x1
jax: 0.10.0
libtpu: 0.0.40
codegen_flags: <defaults>
</compile_context>

<pallas_src>
import functools

import jax
import jax.numpy as jnp
from jax.experimental import pallas as pl
from jax.experimental.pallas import tpu as pltpu

LANES = 128


def _starrelu_kernel(scale_ref, bias_ref, x_ref, o_ref):
    # scale_ref / bias_ref: (1,) f32 in SMEM; x_ref / o_ref: (tr, 128) in VMEM.
    s = scale_ref[0]
    b = bias_ref[0]
    # NOTE: for bf16/fp8 inputs the astype->mul->add chain is expected to fuse
    # per-vreg; VPU has large slack vs the HBM roofline either way.
    x = x_ref[...].astype(jnp.float32)
    r = jnp.maximum(x, 0.0)                       # ReLU
    o_ref[...] = (s * r * r + b).astype(o_ref.dtype)


def _sublane_pack(dtype):
    # sublane packing: 8 rows for 32-bit, 16 for 16-bit, 32 for 8-bit dtypes.
    itemsize = jnp.dtype(dtype).itemsize
    return max(8, 32 // itemsize)


@functools.lru_cache(maxsize=None)
def _chip_config():
    """(tile_bytes, vmem_limit_bytes_or_None, two_tensorcores)."""
    try:
        kind = jax.devices()[0].device_kind.lower()
    except Exception:  # pragma: no cover - defensive
        kind = ""
    # Chips whose grid is split across two TensorCores (megacore / dual-TC).
    two_tc = ("v4" in kind) or ("v5p" in kind) or ("7" in kind)
    if "v6" in kind:
        # v6e (Trillium): 128 MiB physical VMEM -> bigger blocks, explicit limit.
        return 6 << 20, 64 << 20, two_tc
    if "7" in kind:
        # v7x: 64 MiB physical VMEM, 2 TCs; 4 MiB x 4 buffers = 16 MiB.
        return 4 << 20, 40 << 20, two_tc
    # v5e and unknown chips: 2 MiB blocks fit the default scoped VMEM.
    return 2 << 20, None, two_tc


@functools.partial(jax.jit, static_argnums=(3, 4, 5))
def _star_relu_jit(x, scale, bias, tile_bytes, vmem_limit, two_tc):
    orig_shape = x.shape
    dtype = x.dtype
    total = x.size
    itemsize = jnp.dtype(dtype).itemsize
    pack = _sublane_pack(dtype)

    # Scalar parameters, f32, shape (1,) -- matches PyTorch StarReLU defaults.
    # (A per-channel variant would need a different broadcast; not supported.)
    s32 = scale.astype(jnp.float32).reshape(1)
    b32 = bias.astype(jnp.float32).reshape(1)

    if total == 0:
        return x

    if total % LANES != 0:
        # Rare ragged case (element count not a multiple of 128): one fused
        # XLA elementwise pass is already 1 read + 1 write of HBM, i.e. the
        # same cost as the Pallas path, with no pad / slice extra passes.
        xf = x.astype(jnp.float32)
        r = jnp.maximum(xf, 0.0)
        return (s32[0] * r * r + b32[0]).astype(dtype)

    rows = total // LANES
    slab = x.reshape(rows, LANES)                 # free view under jit
    rows_ceil = ((rows + pack - 1) // pack) * pack

    # Tile rows: target ~tile_bytes per block, rounded to the sublane pack.
    tr = (tile_bytes // (LANES * itemsize)) // pack * pack
    tr = max(pack, min(tr, rows_ceil))
    steps = pl.cdiv(rows, tr)

    if two_tc:
        # Give both TensorCores work, and keep small grids even for balance.
        new_steps = steps
        if steps == 1 and rows > pack:
            new_steps = 2
        elif 2 < steps <= 8 and steps % 2 == 1:
            new_steps = steps + 1
        if new_steps != steps:
            tr = ((pl.cdiv(rows, new_steps) + pack - 1) // pack) * pack
            tr = max(pack, min(tr, rows_ceil))
            steps = pl.cdiv(rows, tr)

    cp_kwargs = dict(dimension_semantics=("parallel",))
    if vmem_limit is not None:
        cp_kwargs["vmem_limit_bytes"] = int(vmem_limit)

    cost = pl.CostEstimate(
        flops=3 * total,                      # max, mul, mul (+add)
        transcendentals=0,
        bytes_accessed=2 * total * itemsize,  # one read + one write of x
    )

    out = pl.pallas_call(
        _starrelu_kernel,
        out_shape=jax.ShapeDtypeStruct((rows, LANES), dtype),
        grid_spec=pltpu.PrefetchScalarGridSpec(
            num_scalar_prefetch=0,
            grid=(steps,),
            in_specs=[
                pl.BlockSpec(memory_space=pltpu.SMEM),          # scale (1,) f32
                pl.BlockSpec(memory_space=pltpu.SMEM),          # bias  (1,) f32
                pl.BlockSpec((tr, LANES), lambda i: (i, 0)),    # x tile
            ],
            out_specs=pl.BlockSpec((tr, LANES), lambda i: (i, 0)),
        ),
        compiler_params=pltpu.CompilerParams(**cp_kwargs),
        cost_estimate=cost,
    )(s32, b32, slab)

    return out.reshape(orig_shape)


def star_relu(x, scale, bias):
    """StarReLU: scale * relu(x)**2 + bias.  x: any-shaped float array."""
    tile_bytes, vmem_limit, two_tc = _chip_config()
    return _star_relu_jit(x, scale, bias, tile_bytes, vmem_limit, two_tc)


def _ref(x, scale, bias):
    r = jnp.maximum(x.astype(jnp.float32), 0.0)
    return (scale[0] * r * r + bias[0]).astype(x.dtype)


if __name__ == "__main__":
    key = jax.random.PRNGKey(0)

    # NCHW, like the PyTorch module's conv-style inputs.
    x = jax.random.normal(key, (2, 4, 16, 16), dtype=jnp.float32)

    # Deterministic parameter init matching StarReLU.__init__ defaults.
    scale = 1.0 * jnp.ones((1,), dtype=jnp.float32)
    bias = 0.0 * jnp.ones((1,), dtype=jnp.float32)

    y = jax.block_until_ready(star_relu(x, scale, bias))
    assert y.shape == x.shape and y.dtype == x.dtype
    assert jnp.allclose(y, _ref(x, scale, bias), atol=1e-6, rtol=1e-6)

    # Non-trivial params + row count not a multiple of the sublane pack
    # (2304 elems -> 18 rows) to exercise the ragged last block (no padding).
    x2 = jax.random.normal(jax.random.PRNGKey(1), (3, 3, 16, 16), jnp.float32)
    s2 = 2.0 * jnp.ones((1,), jnp.float32)
    b2 = 0.5 * jnp.ones((1,), jnp.float32)
    y2 = jax.block_until_ready(star_relu(x2, s2, b2))
    assert jnp.allclose(y2, _ref(x2, s2, b2), atol=1e-6, rtol=1e-6)

    # Truly ragged size (not a multiple of 128) -> fused XLA fallback path.
    x3 = jax.random.normal(jax.random.PRNGKey(2), (2, 3, 5, 7), jnp.float32)
    y3 = jax.block_until_ready(star_relu(x3, s2, b2))
    assert y3.shape == x3.shape and y3.dtype == x3.dtype
    assert jnp.allclose(y3, _ref(x3, s2, b2), atol=1e-6, rtol=1e-6)

    print("KERNEL_OK")
</pallas_src>

<mosaic_0001>
module attributes {stable_mosaic.version = 11 : i64} {
  func.func @_starrelu_kernel(%arg0: i32, %arg1: memref<1xf32, #tpu.memory_space<smem>>, %arg2: memref<1xf32, #tpu.memory_space<smem>>, %arg3: memref<16x128xf32, #tpu.memory_space<vmem>>, %arg4: memref<16x128xf32, #tpu.memory_space<vmem>>) attributes {dimension_semantics = [#tpu.dimension_semantics<parallel>], iteration_bounds = array<i64: 1>, scalar_prefetch = 0 : i64, scratch_operands = 0 : i64, tpu.core_type = #tpu.core_type<tc>, window_params = [{transform_indices = @transform_0, window_bounds = array<i64: 1>}, {transform_indices = @transform_1, window_bounds = array<i64: 1>}, {transform_indices = @transform_2, window_bounds = array<i64: 16, 128>}, {transform_indices = @transform_3, window_bounds = array<i64: 16, 128>}]} {
    %c0 = arith.constant 0 : index
    %0 = memref.load %arg1[%c0] : memref<1xf32, #tpu.memory_space<smem>>
    %c0_0 = arith.constant 0 : index
    %1 = memref.load %arg2[%c0_0] : memref<1xf32, #tpu.memory_space<smem>>
    %c0_1 = arith.constant 0 : index
    %c0_2 = arith.constant 0 : index
    %2 = vector.load %arg3[%c0_1, %c0_2] : memref<16x128xf32, #tpu.memory_space<vmem>>, vector<16x128xf32>
    %cst = arith.constant 0.000000e+00 : f32
    %3 = vector.broadcast %cst : f32 to vector<16x128xf32>
    %4 = arith.maximumf %2, %3 : vector<16x128xf32>
    %5 = vector.broadcast %0 : f32 to vector<16x128xf32>
    %6 = arith.mulf %5, %4 : vector<16x128xf32>
    %7 = arith.mulf %6, %4 : vector<16x128xf32>
    %8 = vector.broadcast %1 : f32 to vector<16x128xf32>
    %9 = arith.addf %7, %8 : vector<16x128xf32>
    %c0_3 = arith.constant 0 : index
    %c0_4 = arith.constant 0 : index
    %10 = vector.load %arg4[%c0_3, %c0_4] : memref<16x128xf32, #tpu.memory_space<vmem>>, vector<16x128xf32>
    tpu.vector_store %arg4[%c0_3, %c0_4], %9 {strides = array<i32>} : memref<16x128xf32, #tpu.memory_space<vmem>>, vector<16x128xf32>,
    return
  }
  func.func @transform_0(%arg0: i32) -> i32 {
    %c0_i32 = arith.constant 0 : i32
    %c0_i32_0 = arith.constant 0 : i32
    return %c0_i32 : i32
  }
  func.func @transform_1(%arg0: i32) -> i32 {
    %c0_i32 = arith.constant 0 : i32
    %c0_i32_0 = arith.constant 0 : i32
    return %c0_i32 : i32
  }
  func.func @transform_2(%arg0: i32) -> (i32, i32) {
    %c0_i32 = arith.constant 0 : i32
    %c0_i32_0 = arith.constant 0 : i32
    return %arg0, %c0_i32 : i32, i32
  }
  func.func @transform_3(%arg0: i32) -> (i32, i32) {
    %c0_i32 = arith.constant 0 : i32
    %c0_i32_0 = arith.constant 0 : i32
    return %arg0, %c0_i32 : i32, i32
  }
}

</mosaic_0001>

<llo_original>
// kernel: _star_relu_jit.1
$region0: #{_star_relu_jit.1}
  #allocation0 [shape = 'u32[]', space=smem, size = 0x4, offset = 0x4, fixed_abs, tag = 'smem constant byte address 0x4 - core index']
  #allocation1 [shape = 'u32[144,128]{1,0:T(1,128)}', space=vmem, size = 0x12000, scoped, tag = 'internal scratch']
  #allocation2 [shape = 'f32[1]{0:T(128)S(6)}', space=smem, size = 0x200, scoped, tag = 'scoped memory for _star_relu_jit.1']
  #allocation3 [shape = 'f32[1]{0:T(128)S(6)}', space=smem, size = 0x200, scoped, tag = 'scoped memory for _star_relu_jit.1']
  %s0 = inlined_call_operand.<no memory space> [shape: f32[1], index: 0, kind: input, shape index: {}]
  %s1 = inlined_call_operand.<no memory space> [shape: f32[1], index: 1, kind: input, shape index: {}]
  %s2 = inlined_call_operand.vmem [shape: f32[16,128], index: 2, kind: input, shape index: {}]
  %s3 = inlined_call_operand.vmem [shape: f32[16,128], index: 3, kind: output, shape index: {}]
  %s4 = sld [smem:[#allocation0]]
  $region22: #{_star_relu_jit.1} parent=0
    _
  %s6 = ssub.s32 1, %s4
  %s7 = scalar_select 0, %s6, %s4
  %8 = sst [smem:[#allocation2]] %s0
  %9 = sst [smem:[#allocation3]] %s1
  // Predicated region
  $region2: #{_star_relu_jit.1} parent=0 // pred_check
    _
  $region3: #{_star_relu_jit.1} parent=0 // pred_check_branch
    %11 = sbr.rel (0) target = $region5
  $region4: #{_star_relu_jit.1} parent=0 // pred_region
    _
  $region5: #{_star_relu_jit.1} parent=0 // pred_fallthru
    _
  // Predicated region
  $region6: #{_star_relu_jit.1} parent=0 // pred_check
    _
  $region7: #{_star_relu_jit.1} parent=0 // pred_check_branch
    %13 = sbr.rel (0) target = $region9
  $region8: #{_star_relu_jit.1} parent=0 // pred_region
    _
  $region9: #{_star_relu_jit.1} parent=0 // pred_fallthru
    _
  // Predicated region
  $region10: #{_star_relu_jit.1} parent=0 // pred_check
    _
  $region11: #{_star_relu_jit.1} parent=0 // pred_check_branch
    %15 = sbr.rel (0) target = $region13
  $region12: #{_star_relu_jit.1} parent=0 // pred_region
    _
  $region13: #{_star_relu_jit.1} parent=0 // pred_fallthru
    _
  %s16 = sld [smem:[#allocation2]]
  %s17 = sld [smem:[#allocation3]]
  %v18 = vld [vmem:[%s2] sm:$0xff]
  %v19 = vld [vmem:[%s2 + $0x8] sm:$0xff]
  %v20 = vmax.f32 %v18, 0.0
  %v21 = vmax.f32 %v19, 0.0
  %v22 = vstv %s16
  %v23 = vmul.f32 %v22, %v20
  %v24 = vmul.f32 %v22, %v21
  %v25 = vmul.f32 %v23, %v20
  %v26 = vmul.f32 %v24, %v21
  %v27 = vstv %s17
  %v28 = vadd.f32 %v25, %v27
  %v29 = vadd.f32 %v26, %v27
  %30 = vst [vmem:[%s3] sm:$0xff] %v28
  %31 = vst [vmem:[%s3 + $0x8] sm:$0xff] %v29
  // Predicated region
  $region14: #{_star_relu_jit.1} parent=0 // pred_check
    _
  $region15: #{_star_relu_jit.1} parent=0 // pred_check_branch
    %33 = sbr.rel (0) target = $region17
  $region16: #{_star_relu_jit.1} parent=0 // pred_region
    _
  $region17: #{_star_relu_jit.1} parent=0 // pred_fallthru
    _
  // Predicated region
  $region18: #{_star_relu_jit.1} parent=0 // pred_check
    _
  $region19: #{_star_relu_jit.1} parent=0 // pred_check_branch
    %35 = sbr.rel (0) target = $region21
  $region20: #{_star_relu_jit.1} parent=0 // pred_region
    _
  $region21: #{_star_relu_jit.1} parent=0 // pred_fallthru
    _

</llo_original>
